<compile_context>
chip_gen: v5e
topology: v5e:2x2
jax: 0.10.0
libtpu: 0.0.40
codegen_flags: <defaults>
</compile_context>

<pallas_src>
import math

import numpy as np
import jax
import jax.numpy as jnp
from jax.experimental import pallas as pl
from jax.experimental.pallas import tpu as pltpu


# --------------------------------------------------------------------------- #
# helpers
# --------------------------------------------------------------------------- #
def _round_up(x: int, m: int) -> int:
    return ((x + m - 1) // m) * m


def _vmem_limit_bytes() -> int:
    """Per-generation scoped VMEM limit with headroom under physical VMEM."""
    cap = 128 * 1024 * 1024
    try:
        info = pltpu.get_tpu_info()
        cap = int(getattr(info, "vmem_capacity_bytes", cap))
    except Exception:
        pass
    # 64 MiB parts (v7x) -> ~48 MiB; 128 MiB parts (v5e/v6e) -> 100 MiB.
    return int(min(max(cap - 16 * 1024 * 1024, 32 * 1024 * 1024),
                   100 * 1024 * 1024))


def _fused_vmem_bytes(tm, tk, vp, op_bytes, out_bytes):
    return (tm * vp * 4                   # f32 accumulator scratch
            + 2 * tm * tk * op_bytes      # x tiles (double buffered)
            + 2 * tk * vp * op_bytes      # W slab  (double buffered)
            + 2 * vp * 4                  # bias
            + 2 * tm * vp * out_bytes)    # output  (double buffered)


# --------------------------------------------------------------------------- #
# kernel 1 (fused path): logits = x @ W + b accumulated over K tiles, full
# vocab per block; log_softmax over the lane (vocab) dim on the last K step.
# --------------------------------------------------------------------------- #
def _proj_fused_kernel(x_ref, w_ref, b_ref, o_ref, acc_ref):
    k = pl.program_id(1)

    @pl.when(k == 0)
    def _init():
        acc_ref[...] = jnp.broadcast_to(
            b_ref[...].astype(jnp.float32), acc_ref.shape)

    acc_ref[...] += jnp.dot(x_ref[...], w_ref[...],
                            preferred_element_type=jnp.float32)

    @pl.when(k == pl.num_programs(1) - 1)
    def _finalize():
        z = acc_ref[...]
        m = jnp.max(z, axis=-1, keepdims=True)
        # TODO(synk): on v6e/v7x the exp could run in bf16 on the EUP (sum kept
        # in f32) to shave the finalize tail; kept f32 here for accuracy.
        lse = m + jnp.log(jnp.sum(jnp.exp(z - m), axis=-1, keepdims=True))
        o_ref[...] = (z - lse).astype(o_ref.dtype)


# --------------------------------------------------------------------------- #
# kernel 2a/2b (V-tiled path for large vocab / v7x's 64 MiB VMEM):
#   2a: grid (M/tm, V/tv, K/tk) -> raw logits (M,V) + online logsumexp (M,1)
#   2b: element-wise normalize out = logits - lse
# --------------------------------------------------------------------------- #
def _proj_logits_lse_kernel(x_ref, w_ref, b_ref, z_ref, lse_ref,
                            acc_ref, m_ref, l_ref):
    v = pl.program_id(1)
    k = pl.program_id(2)
    nv = pl.num_programs(1)
    nk = pl.num_programs(2)

    @pl.when((v == 0) & (k == 0))
    def _init_row():
        m_ref[...] = jnp.full_like(m_ref, -jnp.inf)
        l_ref[...] = jnp.zeros_like(l_ref)

    @pl.when(k == 0)
    def _init_acc():
        acc_ref[...] = jnp.broadcast_to(
            b_ref[...].astype(jnp.float32), acc_ref.shape)

    acc_ref[...] += jnp.dot(x_ref[...], w_ref[...],
                            preferred_element_type=jnp.float32)

    @pl.when(k == nk - 1)
    def _tile_done():
        z = acc_ref[...]
        m_old = m_ref[...]
        m_new = jnp.maximum(m_old, jnp.max(z, axis=-1, keepdims=True))
        l_ref[...] = (l_ref[...] * jnp.exp(m_old - m_new)
                      + jnp.sum(jnp.exp(z - m_new), axis=-1, keepdims=True))
        m_ref[...] = m_new
        z_ref[...] = z

    @pl.when((v == nv - 1) & (k == nk - 1))
    def _row_done():
        lse_ref[...] = m_ref[...] + jnp.log(l_ref[...])


def _normalize_kernel(z_ref, lse_ref, o_ref):
    o_ref[...] = (z_ref[...] - lse_ref[...]).astype(o_ref.dtype)


# --------------------------------------------------------------------------- #
# wrapper
# --------------------------------------------------------------------------- #
def projection_layer(x, w, b, *, tm=None, tk=None, tv=None, impl=None,
                     operand_dtype=jnp.bfloat16, out_dtype=None):
    """log_softmax(x @ w + b, axis=-1).

    x: (..., d_model)   w: (d_model, vocab)   b: (vocab,)
    Returns (..., vocab) in out_dtype (default: x.dtype, matching PyTorch).
    """
    *lead, D = x.shape
    V = w.shape[1]
    assert w.shape == (D, V) and b.shape == (V,)
    out_dtype = x.dtype if out_dtype is None else out_dtype

    M = int(math.prod(lead)) if lead else 1
    op_bytes = np.dtype(operand_dtype).itemsize
    out_bytes = np.dtype(out_dtype).itemsize

    vmem_limit = _vmem_limit_bytes()
    budget = max(vmem_limit - 4 * 1024 * 1024, 16 * 1024 * 1024)

    # ---- padded problem sizes -------------------------------------------
    Vp = _round_up(V, 128)                       # lane-dense vocab
    if tk is None:
        tk = D if D <= 256 else 256              # matches 256-deep MXU pass
    Dp = _round_up(D, tk)
    tm_cap = max(8, _round_up(M, 8))

    # ---- pick row tile and implementation -------------------------------
    tm_fused = None
    if tm is None:
        for cand in (512, 256, 128, 64, 32, 16, 8):
            if cand <= tm_cap and _fused_vmem_bytes(
                    cand, tk, Vp, op_bytes, out_bytes) <= budget:
                tm_fused = cand
                break
    elif _fused_vmem_bytes(tm, tk, Vp, op_bytes, out_bytes) <= budget:
        tm_fused = tm

    if impl is None:
        impl = "fused" if tm_fused is not None else "tiled"

    if impl == "fused":
        if tm is None:
            assert tm_fused is not None, \
                "fused path does not fit VMEM; use impl='tiled'"
            tm = tm_fused
    else:
        if tm is None:
            tm = min(256, tm_cap)
        if tv is None:
            if Vp % 512 == 0 and Vp > 512:
                tv = 512
            elif Vp % 256 == 0 and Vp > 256:
                tv = 256
            else:
                tv = min(128, Vp)

    Mp = _round_up(M, tm)

    # ---- pad + cast operands (W cast ONCE here, not per grid step) ------
    x2 = x.reshape(M, D)
    if (Mp, Dp) != (M, D):
        x2 = jnp.pad(x2, ((0, Mp - M), (0, Dp - D)))
    wp = w if (Dp, Vp) == (D, V) else jnp.pad(w, ((0, Dp - D), (0, Vp - V)))
    bp = b.astype(jnp.float32)
    if Vp != V:
        # Padded vocab columns get a hugely negative bias -> exp() == 0,
        # so they never perturb the logsumexp; sliced off below.
        bp = jnp.pad(bp, (0, Vp - V), constant_values=-1e30)
    x_op = x2.astype(operand_dtype)
    w_op = wp.astype(operand_dtype)
    b2 = bp.reshape(1, Vp)

    cost = pl.CostEstimate(
        flops=int(2 * Mp * Dp * Vp),
        transcendentals=int(Mp * Vp),
        bytes_accessed=int(Mp * Dp * op_bytes
                           + (Mp // tm) * Dp * Vp * op_bytes
                           + Mp * Vp * out_bytes),
    )

    if impl == "fused":
        grid = (Mp // tm, Dp // tk)
        out = pl.pallas_call(
            _proj_fused_kernel,
            out_shape=jax.ShapeDtypeStruct((Mp, Vp), out_dtype),
            grid_spec=pltpu.PrefetchScalarGridSpec(
                num_scalar_prefetch=0,
                grid=grid,
                in_specs=[
                    pl.BlockSpec((tm, tk), lambda i, k: (i, k)),   # x rows
                    pl.BlockSpec((tk, Vp), lambda i, k: (k, 0)),   # W slab
                    pl.BlockSpec((1, Vp), lambda i, k: (0, 0)),    # bias
                ],
                out_specs=pl.BlockSpec((tm, Vp), lambda i, k: (i, 0)),
                scratch_shapes=[pltpu.VMEM((tm, Vp), jnp.float32)],
            ),
            compiler_params=pltpu.CompilerParams(
                dimension_semantics=("parallel", "arbitrary"),
                vmem_limit_bytes=vmem_limit,
            ),
            cost_estimate=cost,
        )(x_op, w_op, b2)
    else:
        # TODO(synk): on v7x, shard the V axis across the two TensorCores
        # (per-core partial max/sum + a tiny combine) so each core streams
        # only half of W instead of duplicating the weight traffic.
        grid = (Mp // tm, Vp // tv, Dp // tk)
        z, lse = pl.pallas_call(
            _proj_logits_lse_kernel,
            out_shape=(
                jax.ShapeDtypeStruct((Mp, Vp), jnp.float32),
                jax.ShapeDtypeStruct((Mp, 1), jnp.float32),
            ),
            grid_spec=pltpu.PrefetchScalarGridSpec(
                num_scalar_prefetch=0,
                grid=grid,
                in_specs=[
                    pl.BlockSpec((tm, tk), lambda i, v, k: (i, k)),
                    pl.BlockSpec((tk, tv), lambda i, v, k: (k, v)),
                    pl.BlockSpec((1, tv), lambda i, v, k: (0, v)),
                ],
                out_specs=[
                    pl.BlockSpec((tm, tv), lambda i, v, k: (i, v)),
                    pl.BlockSpec((tm, 1), lambda i, v, k: (i, 0)),
                ],
                scratch_shapes=[
                    pltpu.VMEM((tm, tv), jnp.float32),   # logits accumulator
                    pltpu.VMEM((tm, 1), jnp.float32),    # running max
                    pltpu.VMEM((tm, 1), jnp.float32),    # running sum
                ],
            ),
            compiler_params=pltpu.CompilerParams(
                dimension_semantics=("parallel", "arbitrary", "arbitrary"),
                vmem_limit_bytes=vmem_limit,
            ),
            cost_estimate=cost,
        )(x_op, w_op, b2)

        out = pl.pallas_call(
            _normalize_kernel,
            out_shape=jax.ShapeDtypeStruct((Mp, Vp), out_dtype),
            grid_spec=pltpu.PrefetchScalarGridSpec(
                num_scalar_prefetch=0,
                grid=(Mp // tm, Vp // tv),
                in_specs=[
                    pl.BlockSpec((tm, tv), lambda i, v: (i, v)),
                    pl.BlockSpec((tm, 1), lambda i, v: (i, 0)),
                ],
                out_specs=pl.BlockSpec((tm, tv), lambda i, v: (i, v)),
            ),
            compiler_params=pltpu.CompilerParams(
                dimension_semantics=("parallel", "parallel"),
                vmem_limit_bytes=vmem_limit,
            ),
        )(z, lse)

    out = out[:M, :V]
    return out.reshape(*lead, V)


# --------------------------------------------------------------------------- #
# params (torch.nn.Linear default init, weight stored pre-transposed)
# --------------------------------------------------------------------------- #
def init_params(key, d_model, vocab_size):
    kw, kb = jax.random.split(key)
    lim = 1.0 / math.sqrt(d_model)
    w = jax.random.uniform(kw, (d_model, vocab_size), jnp.float32, -lim, lim)
    b = jax.random.uniform(kb, (vocab_size,), jnp.float32, -lim, lim)
    return w, b


# --------------------------------------------------------------------------- #
if __name__ == "__main__":
    key = jax.random.PRNGKey(0)
    k1, k2, k3, k4 = jax.random.split(key, 4)

    # Case 1: fused path -- odd sequence length (exercises M padding) and a
    # vocab that is not a multiple of 128 (exercises V padding).
    B, S, d_model, vocab = 2, 7, 32, 200
    x = jax.random.normal(k1, (B, S, d_model), jnp.float32)
    w, b = init_params(k2, d_model, vocab)
    out = jax.block_until_ready(projection_layer(x, w, b))
    assert out.shape == (B, S, vocab) and out.dtype == jnp.float32
    assert bool(jnp.all(jnp.isfinite(out)))

    ref_bf16 = jax.nn.log_softmax(
        jnp.dot(x.astype(jnp.bfloat16), w.astype(jnp.bfloat16),
                preferred_element_type=jnp.float32) + b, axis=-1)
    ref_f32 = jax.nn.log_softmax(x @ w + b, axis=-1)
    assert bool(jnp.allclose(out, ref_bf16, atol=2e-3, rtol=2e-3)), (
        float(jnp.max(jnp.abs(out - ref_bf16))))
    # bf16 MXU operands -> looser tolerance vs the pure-f32 reference.
    assert bool(jnp.allclose(out, ref_f32, atol=5e-2, rtol=5e-2))
    assert bool(jnp.allclose(
        jax.scipy.special.logsumexp(out, axis=-1), 0.0, atol=1e-4))

    # Case 2: K-tiled accumulation; cross-check the fused path against the
    # V-tiled online-logsumexp path (the large-vocab / v7x configuration).
    B2, S2, d2, v2 = 2, 32, 256, 512
    x2 = jax.random.normal(k3, (B2, S2, d2), jnp.float32)
    w2, b2 = init_params(k4, d2, v2)
    out_f = jax.block_until_ready(
        projection_layer(x2, w2, b2, tk=128, impl="fused"))
    out_t = jax.block_until_ready(
        projection_layer(x2, w2, b2, tk=128, tv=128, impl="tiled"))
    ref2 = jax.nn.log_softmax(
        jnp.dot(x2.astype(jnp.bfloat16), w2.astype(jnp.bfloat16),
                preferred_element_type=jnp.float32) + b2, axis=-1)
    assert bool(jnp.allclose(out_f, ref2, atol=5e-3, rtol=5e-3))
    assert bool(jnp.allclose(out_t, ref2, atol=5e-3, rtol=5e-3))
    assert bool(jnp.allclose(out_f, out_t, atol=2e-3, rtol=2e-3))

    print("KERNEL_OK")
</pallas_src>

<mosaic_0001>
module attributes {stable_mosaic.version = 11 : i64} {
  func.func @_proj_fused_kernel(%arg0: i32, %arg1: i32, %arg2: memref<16x32xbf16, #tpu.memory_space<vmem>>, %arg3: memref<32x256xbf16, #tpu.memory_space<vmem>>, %arg4: memref<1x256xf32, #tpu.memory_space<vmem>>, %arg5: memref<16x256xf32, #tpu.memory_space<vmem>>, %arg6: memref<16x256xf32, #tpu.memory_space<vmem>>) attributes {dimension_semantics = [#tpu.dimension_semantics<parallel>, #tpu.dimension_semantics<arbitrary>], iteration_bounds = array<i64: 1, 1>, scalar_prefetch = 0 : i64, scratch_operands = 1 : i64, tpu.core_type = #tpu.core_type<tc>, window_params = [{transform_indices = @transform_0, window_bounds = array<i64: 16, 32>}, {transform_indices = @transform_1, window_bounds = array<i64: 32, 256>}, {pipeline_mode = #tpu.pipeline_mode<synchronous>, transform_indices = @transform_2, window_bounds = array<i64: 1, 256>}, {transform_indices = @transform_3, window_bounds = array<i64: 16, 256>}]} {
    %c0_i32 = arith.constant 0 : i32
    %0 = arith.cmpi eq, %arg1, %c0_i32 : i32
    %1 = arith.extui %0 : i1 to i32
    %c0_i32_0 = arith.constant 0 : i32
    %2 = arith.cmpi ne, %1, %c0_i32_0 : i32
    scf.if %2 {
      %c0_10 = arith.constant 0 : index
      %c0_11 = arith.constant 0 : index
      %12 = vector.load %arg4[%c0_10, %c0_11] : memref<1x256xf32, #tpu.memory_space<vmem>>, vector<1x256xf32>
      %13 = vector.shape_cast %12 : vector<1x256xf32> to vector<1x256xf32>
      %14 = vector.broadcast %13 : vector<1x256xf32> to vector<16x256xf32>
      %c0_12 = arith.constant 0 : index
      %c0_13 = arith.constant 0 : index
      %15 = vector.load %arg6[%c0_12, %c0_13] : memref<16x256xf32, #tpu.memory_space<vmem>>, vector<16x256xf32>
      tpu.vector_store %arg6[%c0_12, %c0_13], %14 {strides = array<i32>} : memref<16x256xf32, #tpu.memory_space<vmem>>, vector<16x256xf32>,
    } else {
    }
    %c0 = arith.constant 0 : index
    %c0_1 = arith.constant 0 : index
    %3 = vector.load %arg6[%c0, %c0_1] : memref<16x256xf32, #tpu.memory_space<vmem>>, vector<16x256xf32>
    %c0_2 = arith.constant 0 : index
    %c0_3 = arith.constant 0 : index
    %4 = vector.load %arg2[%c0_2, %c0_3] : memref<16x32xbf16, #tpu.memory_space<vmem>>, vector<16x32xbf16>
    %c0_4 = arith.constant 0 : index
    %c0_5 = arith.constant 0 : index
    %5 = vector.load %arg3[%c0_4, %c0_5] : memref<32x256xbf16, #tpu.memory_space<vmem>>, vector<32x256xbf16>
    %cst = arith.constant dense<0.000000e+00> : vector<16x256xf32>
    %6 = tpu.matmul %4, %5, %cst {dimension_numbers = #tpu.dot_dimension_numbers<[1], [0], [0], [1], [0, 0, 1, 1], [], []>} : vector<16x32xbf16>, vector<32x256xbf16>, vector<16x256xf32> -> vector<16x256xf32>
    %7 = arith.addf %3, %6 : vector<16x256xf32>
    %c0_6 = arith.constant 0 : index
    %c0_7 = arith.constant 0 : index
    %8 = vector.load %arg6[%c0_6, %c0_7] : memref<16x256xf32, #tpu.memory_space<vmem>>, vector<16x256xf32>
    tpu.vector_store %arg6[%c0_6, %c0_7], %7 {strides = array<i32>} : memref<16x256xf32, #tpu.memory_space<vmem>>, vector<16x256xf32>,
    %c0_i32_8 = arith.constant 0 : i32
    %9 = arith.cmpi eq, %arg1, %c0_i32_8 : i32
    %10 = arith.extui %9 : i1 to i32
    %c0_i32_9 = arith.constant 0 : i32
    %11 = arith.cmpi ne, %10, %c0_i32_9 : i32
    scf.if %11 {
      %c0_10 = arith.constant 0 : index
      %c0_11 = arith.constant 0 : index
      %12 = vector.load %arg6[%c0_10, %c0_11] : memref<16x256xf32, #tpu.memory_space<vmem>>, vector<16x256xf32>
      %cst_12 = arith.constant dense<0xFF800000> : vector<16xf32>
      %13 = vector.multi_reduction <maximumf>, %12, %cst_12 [1] : vector<16x256xf32> to vector<16xf32>
      %14 = vector.shape_cast %13 : vector<16xf32> to vector<16x1xf32>
      %15 = vector.broadcast %14 : vector<16x1xf32> to vector<16x256xf32>
      %16 = arith.subf %12, %15 : vector<16x256xf32>
      %17 = math.exp %16 : vector<16x256xf32>
      %cst_13 = arith.constant dense<0.000000e+00> : vector<16xf32>
      %18 = vector.multi_reduction <add>, %17, %cst_13 [1] : vector<16x256xf32> to vector<16xf32>
      %19 = vector.shape_cast %18 : vector<16xf32> to vector<16x1xf32>
      %20 = math.log %19 : vector<16x1xf32>
      %21 = arith.addf %14, %20 : vector<16x1xf32>
      %22 = vector.broadcast %21 : vector<16x1xf32> to vector<16x256xf32>
      %23 = arith.subf %12, %22 : vector<16x256xf32>
      %c0_14 = arith.constant 0 : index
      %c0_15 = arith.constant 0 : index
      %24 = vector.load %arg5[%c0_14, %c0_15] : memref<16x256xf32, #tpu.memory_space<vmem>>, vector<16x256xf32>
      tpu.vector_store %arg5[%c0_14, %c0_15], %23 {strides = array<i32>} : memref<16x256xf32, #tpu.memory_space<vmem>>, vector<16x256xf32>,
    } else {
    }
    return
  }
  func.func @transform_0(%arg0: i32, %arg1: i32) -> (i32, i32) {
    %c0_i32 = arith.constant 0 : i32
    return %arg0, %arg1 : i32, i32
  }
  func.func @transform_1(%arg0: i32, %arg1: i32) -> (i32, i32) {
    %c0_i32 = arith.constant 0 : i32
    %c0_i32_0 = arith.constant 0 : i32
    return %arg1, %c0_i32 : i32, i32
  }
  func.func @transform_2(%arg0: i32, %arg1: i32) -> (i32, i32) {
    %c0_i32 = arith.constant 0 : i32
    %c0_i32_0 = arith.constant 0 : i32
    %c0_i32_1 = arith.constant 0 : i32
    return %c0_i32, %c0_i32_0 : i32, i32
  }
  func.func @transform_3(%arg0: i32, %arg1: i32) -> (i32, i32) {
    %c0_i32 = arith.constant 0 : i32
    %c0_i32_0 = arith.constant 0 : i32
    return %arg0, %c0_i32 : i32, i32
  }
}

</mosaic_0001>

<llo_original>
// kernel: tpu_custom_call.1
$region0: #{tpu_custom_call.1}
  #allocation0 [shape = 'u32[]', space=smem, size = 0x4, offset = 0x4, fixed_abs, tag = 'smem constant byte address 0x4 - core index']
  #allocation1 [shape = 'u32[72,128]{1,0:T(1,128)}', space=vmem, size = 0x9000, scoped, tag = 'internal scratch']
  #allocation2 [shape = 'f32[16,256]{1,0:T(8,128)}', space=vmem, size = 0x4000, scoped, tag = 'scratch operand']
  %s0 = inlined_call_operand.hbm [shape: bf16[16,32], index: 0, kind: input, shape index: {}]
  %s1 = inlined_call_operand.hbm [shape: bf16[32,256], index: 1, kind: input, shape index: {}]
  %s2 = inlined_call_operand.hbm [shape: f32[1,256], index: 2, kind: input, shape index: {}]
  %s3 = inlined_call_operand.hbm [shape: f32[16,256], index: 3, kind: output, shape index: {}]
  %s4 = sld [smem:[#allocation0]]
  $region42: #{tpu_custom_call.1} parent=0
    _
  %s6 = ssub.s32 1, %s4
  %s7 = scalar_select 0, %s6, %s4
  $region1: #{tpu_custom_call.1} parent=0
    #allocation3 [shape = 'u8[4096]{0}', space=vmem, size = 0x1000, scoped, tag = 'input window, operand 0, single buffered']
    #allocation4 [shape = 's32[1]{0}', space=sflag, size = 0x4, scoped, tag = 'scoped memory for tpu_custom_call.1']
    #allocation5 [shape = 's32[1]{0}', space=sflag, size = 0x4, scoped, tag = 'scoped memory for tpu_custom_call.1']
    #allocation6 [shape = 'u8[16384]{0}', space=vmem, size = 0x4000, scoped, tag = 'input window, operand 1, single buffered']
    #allocation7 [shape = 's32[1]{0}', space=sflag, size = 0x4, scoped, tag = 'scoped memory for tpu_custom_call.1']
    #allocation8 [shape = 'u8[1024]{0}', space=vmem, size = 0x400, scoped, tag = 'input window, operand 2, single buffered']
    #allocation9 [shape = 'u8[16384]{0}', space=vmem, size = 0x4000, scoped, tag = 'output window, operand 0, single buffered']
    %8 = vsyncpa [#allocation4], 0
    %9 = vsyncpa [#allocation7], 0
    %10 = vsyncpa [#allocation5], 0
    // Predicated region
    $region2: #{tpu_custom_call.1} parent=1 // pred_check
      _
    $region3: #{tpu_custom_call.1} parent=1 // pred_check_branch
      %12 = sbr.rel (0) target = $region5
    $region4: #{tpu_custom_call.1} parent=1 // pred_region
      %14 = vsyncadd [#allocation4], 0
      %s15 = sshll.u32 %s0, 4
      %s16 = int_to_ptr.hbm [resolvable:$true] %s15
      %s17 = sshll.u32 [#allocation3], 4
      %s18 = int_to_ptr.vmem [resolvable:$true] %s17
      %23 = dma.hbm_to_vmem [thread:$0]  %s16, 128, %s18, [#allocation4], 64, 64, 4
    $region5: #{tpu_custom_call.1} parent=1 // pred_fallthru
      _
    // Predicated region
    $region6: #{tpu_custom_call.1} parent=1 // pred_check
      _
    $region7: #{tpu_custom_call.1} parent=1 // pred_check_branch
      %25 = sbr.rel (0) target = $region9
    $region8: #{tpu_custom_call.1} parent=1 // pred_region
      %27 = vsyncadd [#allocation7], 0
      %s28 = sshll.u32 %s1, 4
      %s29 = int_to_ptr.hbm [resolvable:$true] %s28
      %s30 = sshll.u32 [#allocation6], 4
      %s31 = int_to_ptr.vmem [resolvable:$true] %s30
      %36 = dma.hbm_to_vmem [thread:$0]  %s29, 512, %s31, [#allocation7], 128, 128, 8
    $region9: #{tpu_custom_call.1} parent=1 // pred_fallthru
      _
    // Predicated region
    $region10: #{tpu_custom_call.1} parent=1 // pred_check
      _
    $region11: #{tpu_custom_call.1} parent=1 // pred_check_branch
      %38 = sbr.rel (0) target = $region13
    $region12: #{tpu_custom_call.1} parent=1 // pred_region
      %40 = vsyncadd [#allocation7], 0
      %s42 = sshll.u32 %s2, 4
      %s43 = int_to_ptr.hbm [resolvable:$true] %s42
      %s44 = sshll.u32 [#allocation8], 4
      %s45 = int_to_ptr.vmem [resolvable:$true] %s44
      %47 = dma.hbm_to_vmem [thread:$0]  %s43, 32, %s45, [#allocation7]
    $region13: #{tpu_custom_call.1} parent=1 // pred_fallthru
      _
    // Predicated region
    $region14: #{tpu_custom_call.1} parent=1 // pred_check
      _
    $region15: #{tpu_custom_call.1} parent=1 // pred_check_branch
      %49 = sbr.rel (0) target = $region17
    $region16: #{tpu_custom_call.1} parent=1 // pred_region
      %51 = dma.done [#allocation4], 128
    $region17: #{tpu_custom_call.1} parent=1 // pred_fallthru
      _
    // Predicated region
    $region18: #{tpu_custom_call.1} parent=1 // pred_check
      _
    $region19: #{tpu_custom_call.1} parent=1 // pred_check_branch
      %53 = sbr.rel (0) target = $region21
    $region20: #{tpu_custom_call.1} parent=1 // pred_region
      %55 = dma.done [#allocation7], 512
    $region21: #{tpu_custom_call.1} parent=1 // pred_fallthru
      _
    // Predicated region
    $region22: #{tpu_custom_call.1} parent=1 // pred_check
      _
    $region23: #{tpu_custom_call.1} parent=1 // pred_check_branch
      %57 = sbr.rel (0) target = $region25
    $region24: #{tpu_custom_call.1} parent=1 // pred_region
      %59 = dma.done [#allocation7], 32
    $region25: #{tpu_custom_call.1} parent=1 // pred_fallthru
      _
    %p61 = scmp.eq.s32.totalorder 0, 0
    // Predicated region
    $region26: #{tpu_custom_call.1} parent=1 // pred_check
      %p62 = pneg %p61
    $region27: #{tpu_custom_call.1} parent=1 // pred_check_branch
      %64 = sbr.rel (%p62) target = $region29
    $region28: #{tpu_custom_call.1} parent=1 // pred_region
      %v65 = vld [vmem:[#allocation8] sm:$0x3]
      %v67 = vperm.slane %v65, 0
      %v68 = vperm.slane %v65, 1
      %71 = vst [vmem:[#allocation2] sm:$0xff] %v67
      %72 = vst [vmem:[#allocation2 + $0x8] sm:$0xff] %v68
      %73 = vst [vmem:[#allocation2 + $0x10] sm:$0xff] %v67
      %74 = vst [vmem:[#allocation2 + $0x18] sm:$0xff] %v68
    $region29: #{tpu_custom_call.1} parent=1 // pred_fallthru
      _
    %v75 = vld [vmem:[#allocation2] sm:$0xff]
    %v76 = vld [vmem:[#allocation2 + $0x8] sm:$0xff]
    %v77 = vld [vmem:[#allocation2 + $0x10] sm:$0xff]
    %v78 = vld [vmem:[#allocation2 + $0x18] sm:$0xff]
    %v79 = vld [vmem:[#allocation3] sm:$0xf]
    %v80 = vld [vmem:[#allocation3 + $0x4] sm:$0xf]
    %v81 = vld [vmem:[#allocation6] sm:$0xff]
    %v82 = vld [vmem:[#allocation6 + $0x8] sm:$0xff]
    %v83 = vld [vmem:[#allocation6 + $0x10] sm:$0xff]
    %v84 = vld [vmem:[#allocation6 + $0x18] sm:$0xff]
    %v87 = vunpack.c.l.b16 %v79
    %v88 = vunpack.c.l.b16 %v80
    %v89 = vpack.c.b16 %v88, %v87
    %v94 = vunpack.c.l.b16 %v81
    %v95 = vunpack.c.h.b16 %v81
    %v96 = vunpack.c.l.b16 %v82
    %v97 = vunpack.c.h.b16 %v82
    %v98 = vunpack.c.l.b16 %v83
    %v99 = vunpack.c.h.b16 %v83
    %v100 = vunpack.c.l.b16 %v84
    %v101 = vunpack.c.h.b16 %v84
    %v102 = vpack.c.b16 %v96, %v94
    %v103 = vpack.c.b16 %v97, %v95
    %v104 = vpack.c.b16 %v100, %v98
    %v105 = vpack.c.b16 %v101, %v99
    %vm110 = vcmask 261120
    %v112 = vsel %vm110, %v89, 0
    %114 = vmatpush.bf16.msra.mxu0 0
    %115 = vmatpush.bf16.msra.mxu0 0
    %116 = vmatpush.bf16.msra.mxu0 0
    %117 = vmatpush.bf16.msra.mxu0 0
    %118 = vmatpush.bf16.msra.mxu0 0
    %119 = vmatpush.bf16.msra.mxu0 0
    %120 = vmatpush.bf16.msra.mxu0 %v104
    %121 = vmatpush.bf16.msra.mxu0 %v102
    %122 = vmatmul.bf16.gmra.mxu0 %v112
    %v123 = vpop.f32.mrf.mxu0
    %v124 = vadd.f32 0.0, %v123
    %v125 = vpop.f32.mrf.mxu0
    %v126 = vadd.f32 0.0, %v125
    %127 = vdwg.mxu0
    %128 = vmatpush.bf16.msra.mxu0 0
    %129 = vmatpush.bf16.msra.mxu0 0
    %130 = vmatpush.bf16.msra.mxu0 0
    %131 = vmatpush.bf16.msra.mxu0 0
    %132 = vmatpush.bf16.msra.mxu0 0
    %133 = vmatpush.bf16.msra.mxu0 0
    %134 = vmatpush.bf16.msra.mxu0 %v105
    %135 = vmatpush.bf16.msra.mxu0 %v103
    %136 = vmatmul.bf16.gmra.mxu0 %v112
    %v137 = vpop.f32.mrf.mxu0
    %v138 = vadd.f32 0.0, %v137
    %v139 = vpop.f32.mrf.mxu0
    %v140 = vadd.f32 0.0, %v139
    %141 = vdwg.mxu0
    %v142 = vadd.f32 %v75, %v124
    %v143 = vadd.f32 %v76, %v138
    %v144 = vadd.f32 %v77, %v126
    %v145 = vadd.f32 %v78, %v140
    %146 = vst [vmem:[#allocation2] sm:$0xff] %v142
    %147 = vst [vmem:[#allocation2 + $0x8] sm:$0xff] %v143
    %148 = vst [vmem:[#allocation2 + $0x10] sm:$0xff] %v144
    %149 = vst [vmem:[#allocation2 + $0x18] sm:$0xff] %v145
    // Predicated region
    $region30: #{tpu_custom_call.1} parent=1 // pred_check
      %p150 = pneg %p61
    $region31: #{tpu_custom_call.1} parent=1 // pred_check_branch
      %152 = sbr.rel (%p150) target = $region33
    $region32: #{tpu_custom_call.1} parent=1 // pred_region
      %v153 = vld [vmem:[#allocation2] sm:$0xff]
      %v154 = vld [vmem:[#allocation2 + $0x8] sm:$0xff]
      %v155 = vld [vmem:[#allocation2 + $0x10] sm:$0xff]
      %v156 = vld [vmem:[#allocation2 + $0x18] sm:$0xff]
      %v157 = vmax.f32 %v153, %v154
      %158 = vmax.xlane.f32.xlu0 %v157
      %v159 = vpop.xlane.xlu0 %158
      %v160 = vmax.f32 %v155, %v156
      %161 = vmax.xlane.f32.xlu0 %v160
      %v162 = vpop.xlane.xlu0 %161
      %v163 = vsub.f32 %v153, %v159
      %v164 = vsub.f32 %v154, %v159
      %v165 = vsub.f32 %v155, %v162
      %v166 = vsub.f32 %v156, %v162
      %v167 = vmul.f32 %v163, 1.442695
      %v168 = vpow.pop %v167
      %v169 = vmul.f32 %v164, 1.442695
      %v170 = vpow.pop %v169
      %v171 = vmul.f32 %v165, 1.442695
      %v172 = vpow.pop %v171
      %v173 = vmul.f32 %v166, 1.442695
      %v174 = vpow.pop %v173
      %v175 = vadd.f32 %v168, %v170
      %176 = vadd.xlane.f32.xlu0 %v175
      %v177 = vpop.xlane.xlu0 %176
      %v178 = vadd.f32 %v172, %v174
      %179 = vadd.xlane.f32.xlu0 %v178
      %v180 = vpop.xlane.xlu0 %179
      %v181 = vlog2.pop %v177
      %v182 = vmul.f32 %v181, 0.6931472
      %v183 = vlog2.pop %v180
      %v184 = vmul.f32 %v183, 0.6931472
      %v185 = vadd.f32 %v159, %v182
      %v186 = vadd.f32 %v162, %v184
      %v187 = vsub.f32 %v153, %v185
      %v188 = vsub.f32 %v154, %v185
      %v189 = vsub.f32 %v155, %v186
      %v190 = vsub.f32 %v156, %v186
      %191 = vst [vmem:[#allocation9] sm:$0xff] %v187
      %192 = vst [vmem:[#allocation9 + $0x8] sm:$0xff] %v188
      %193 = vst [vmem:[#allocation9 + $0x10] sm:$0xff] %v189
      %194 = vst [vmem:[#allocation9 + $0x18] sm:$0xff] %v190
    $region33: #{tpu_custom_call.1} parent=1 // pred_fallthru
      _
    // Predicated region
    $region34: #{tpu_custom_call.1} parent=1 // pred_check
      _
    $region35: #{tpu_custom_call.1} parent=1 // pred_check_branch
      %196 = sbr.rel (0) target = $region37
    $region36: #{tpu_custom_call.1} parent=1 // pred_region
      %198 = vsyncadd [#allocation5], 0
      %s199 = sshll.u32 [#allocation9], 4
      %s200 = int_to_ptr.vmem [resolvable:$true] %s199
      %s201 = sshll.u32 %s3, 4
      %s202 = int_to_ptr.hbm [resolvable:$true] %s201
      %207 = dma.vmem_to_hbm [thread:$0]  %s200, 512, %s202, [#allocation5], 256, 256, 16
    $region37: #{tpu_custom_call.1} parent=1 // pred_fallthru
      _
    // Predicated region
    $region38: #{tpu_custom_call.1} parent=1 // pred_check
      _
    $region39: #{tpu_custom_call.1} parent=1 // pred_check_branch
      %209 = sbr.rel (0) target = $region41
    $region40: #{tpu_custom_call.1} parent=1 // pred_region
      %211 = dma.done [#allocation5], 512
    $region41: #{tpu_custom_call.1} parent=1 // pred_fallthru
      _
    %212 = vsyncpa [#allocation4], 1
    %213 = vsyncpa [#allocation7], 1
    %214 = vsyncpa [#allocation5], 1

</llo_original>
